<compile_context>
chip_gen: v5e
topology: v5e:2x2
jax: 0.10.0
libtpu: 0.0.40
codegen_flags: <defaults>
</compile_context>

<pallas_src>
import jax
import jax.numpy as jnp
from jax.experimental import pallas as pl
from jax.experimental.pallas import tpu as pltpu


def _repeat_kernel(x_ref, o_ref):
    # x_ref: (bl, S, bt); o_ref: (bl, kr, S, bt).  Write `kr` copies of the
    # input tile into this step's slot of the (L, n_repeat, S, T) output view.
    o_ref[...] = jnp.broadcast_to(jnp.expand_dims(x_ref[...], 1), o_ref.shape)


def _largest_divisor_leq(n, cap):
    """Largest divisor of n that is <= cap (trace-time helper)."""
    cap = int(max(1, min(n, cap, 4096)))
    for d in range(cap, 0, -1):
        if n % d == 0:
            return d
    return 1


def pallas_repeat(x, dim, n_repeat):
    """Equivalent of Repeat(dim, n_repeat)(x): torch .repeat with n_repeat on
    axis `dim` and 1 elsewhere (== jnp.tile along that axis)."""
    ndim = x.ndim
    if dim < 0:
        dim += ndim
    assert 0 <= dim < ndim, (dim, ndim)
    n_repeat = int(n_repeat)

    out_final_shape = tuple(
        s * n_repeat if a == dim else s for a, s in enumerate(x.shape)
    )
    if x.size == 0:
        return jnp.zeros(out_final_shape, x.dtype)
    if n_repeat == 1:
        return x

    # Lane-dense collapsed view: (L, S, T).
    L = 1
    for s in x.shape[:dim]:
        L *= s
    S = x.shape[dim]
    T = 1
    for s in x.shape[dim + 1:]:
        T *= s

    itemsize = x.dtype.itemsize
    TARGET = 2 << 20  # ~2 MiB per output block -> ~8 MiB double-buffered VMEM

    row_bytes = S * T * itemsize  # one copy of one leading-row
    if row_bytes <= TARGET:
        bt = T
        bl = _largest_divisor_leq(L, TARGET // row_bytes)
        kr = _largest_divisor_leq(n_repeat, max(1, TARGET // (bl * row_bytes)))
    else:
        # A single (S, T) row is already large: tile the lane axis instead.
        bl, kr = 1, 1
        if T % 128 == 0 and T > 128:
            lane_units = max(1, TARGET // (S * 128 * itemsize))
            bt = 128 * _largest_divisor_leq(T // 128, lane_units)
        else:
            # TODO(synk): huge rows whose trailing extent is not a multiple of
            # 128 fall back to full-row blocks (may need vmem_limit_bytes).
            bt = T

    x3 = x.reshape(L, S, T)
    grid = (L // bl, T // bt, n_repeat // kr)

    # Input block: (bl, S, bt); its index is invariant along the repeat axis,
    # so the pipeline re-fetches it only when the (L, T) tile changes.
    in_spec = pl.BlockSpec((bl, S, bt), lambda i, t, r: (i, 0, t))
    # Output viewed as (L, n_repeat, S, T); last-two block dims are
    # full-extent (S) / 128-multiple-or-full (bt) -> always legal & lane-dense.
    out_spec = pl.BlockSpec((bl, kr, S, bt), lambda i, t, r: (i, r, 0, t))

    bytes_accessed = (1 + n_repeat) * x.size * itemsize

    out4 = pl.pallas_call(
        _repeat_kernel,
        out_shape=jax.ShapeDtypeStruct((L, n_repeat, S, T), x.dtype),
        grid_spec=pltpu.PrefetchScalarGridSpec(
            num_scalar_prefetch=0,
            grid=grid,
            in_specs=[in_spec],
            out_specs=out_spec,
        ),
        compiler_params=pltpu.CompilerParams(
            # Every grid step writes a disjoint output block -> all parallel;
            # lets v7x shard across its two TensorCores (no-op on v5e/v6e).
            dimension_semantics=("parallel", "parallel", "parallel"),
        ),
        cost_estimate=pl.CostEstimate(
            flops=0, transcendentals=0, bytes_accessed=bytes_accessed
        ),
    )(x3)

    # (L, n, S, T) and (pre..., n*S, post...) share the same row-major layout.
    return out4.reshape(out_final_shape)


if __name__ == "__main__":
    key = jax.random.PRNGKey(0)
    # Small NCHW input consistent with how Repeat is used on feature maps:
    # batch=2, channels=4, spatial=16x16; Repeat(dim=1, n_repeat=3).
    x = jax.random.normal(key, (2, 4, 16, 16), dtype=jnp.float32)
    dim, n_repeat = 1, 3

    out = pallas_repeat(x, dim, n_repeat)
    out = jax.block_until_ready(out)

    # Reference: jnp.tile (same semantics as torch .repeat here).
    reps = [1] * x.ndim
    reps[dim] = n_repeat
    ref = jnp.tile(x, reps)

    assert out.shape == ref.shape, (out.shape, ref.shape)
    assert out.dtype == ref.dtype
    assert bool(jnp.array_equal(out, ref))

    print("KERNEL_OK")
</pallas_src>

<mosaic_0001>
module attributes {stable_mosaic.version = 11 : i64} {
  func.func @_repeat_kernel(%arg0: i32, %arg1: i32, %arg2: i32, %arg3: memref<2x4x256xf32, #tpu.memory_space<vmem>>, %arg4: memref<2x3x4x256xf32, #tpu.memory_space<vmem>>) attributes {dimension_semantics = [#tpu.dimension_semantics<parallel>, #tpu.dimension_semantics<parallel>, #tpu.dimension_semantics<parallel>], iteration_bounds = array<i64: 1, 1, 1>, scalar_prefetch = 0 : i64, scratch_operands = 0 : i64, tpu.core_type = #tpu.core_type<tc>, window_params = [{transform_indices = @transform_0, window_bounds = array<i64: 2, 4, 256>}, {transform_indices = @transform_1, window_bounds = array<i64: 2, 3, 4, 256>}]} {
    %c0 = arith.constant 0 : index
    %c0_0 = arith.constant 0 : index
    %c0_1 = arith.constant 0 : index
    %0 = vector.load %arg3[%c0, %c0_0, %c0_1] : memref<2x4x256xf32, #tpu.memory_space<vmem>>, vector<2x4x256xf32>
    %1 = vector.shape_cast %0 : vector<2x4x256xf32> to vector<2x1x4x256xf32>
    %2 = vector.shape_cast %1 : vector<2x1x4x256xf32> to vector<2x1x4x256xf32>
    %3 = vector.broadcast %2 : vector<2x1x4x256xf32> to vector<2x3x4x256xf32>
    %c0_2 = arith.constant 0 : index
    %c0_3 = arith.constant 0 : index
    %c0_4 = arith.constant 0 : index
    %c0_5 = arith.constant 0 : index
    %4 = vector.load %arg4[%c0_2, %c0_3, %c0_4, %c0_5] : memref<2x3x4x256xf32, #tpu.memory_space<vmem>>, vector<2x3x4x256xf32>
    tpu.vector_store %arg4[%c0_2, %c0_3, %c0_4, %c0_5], %3 {strides = array<i32>} : memref<2x3x4x256xf32, #tpu.memory_space<vmem>>, vector<2x3x4x256xf32>,
    return
  }
  func.func @transform_0(%arg0: i32, %arg1: i32, %arg2: i32) -> (i32, i32, i32) {
    %c0_i32 = arith.constant 0 : i32
    %c0_i32_0 = arith.constant 0 : i32
    return %arg0, %c0_i32, %arg1 : i32, i32, i32
  }
  func.func @transform_1(%arg0: i32, %arg1: i32, %arg2: i32) -> (i32, i32, i32, i32) {
    %c0_i32 = arith.constant 0 : i32
    %c0_i32_0 = arith.constant 0 : i32
    return %arg0, %arg2, %c0_i32, %arg1 : i32, i32, i32, i32
  }
}

</mosaic_0001>

<llo_original>
// kernel: tpu_custom_call.1
$region0: #{tpu_custom_call.1}
  #allocation0 [shape = 'u32[]', space=smem, size = 0x4, offset = 0x4, fixed_abs, tag = 'smem constant byte address 0x4 - core index']
  #allocation1 [shape = 'u32[72,128]{1,0:T(1,128)}', space=vmem, size = 0x9000, scoped, tag = 'internal scratch']
  %s0 = inlined_call_operand.hbm [shape: f32[2,4,256], index: 0, kind: input, shape index: {}]
  %s1 = inlined_call_operand.hbm [shape: f32[2,3,4,256], index: 1, kind: output, shape index: {}]
  %s2 = sld [smem:[#allocation0]]
  $region18: #{tpu_custom_call.1} parent=0
    _
  %s4 = ssub.s32 1, %s2
  %s5 = scalar_select 0, %s4, %s2
  $region1: #{tpu_custom_call.1} parent=0
    #allocation2 [shape = 'u8[8192]{0}', space=vmem, size = 0x2000, scoped, tag = 'input window, operand 0, single buffered']
    #allocation3 [shape = 's32[1]{0}', space=sflag, size = 0x4, scoped, tag = 'scoped memory for tpu_custom_call.1']
    #allocation4 [shape = 's32[1]{0}', space=sflag, size = 0x4, scoped, tag = 'scoped memory for tpu_custom_call.1']
    #allocation5 [shape = 'u8[24576]{0}', space=vmem, size = 0x6000, scoped, tag = 'output window, operand 0, single buffered']
    %6 = vsyncpa [#allocation3], 0
    %7 = vsyncpa [#allocation4], 0
    // Predicated region
    $region2: #{tpu_custom_call.1} parent=1 // pred_check
      _
    $region3: #{tpu_custom_call.1} parent=1 // pred_check_branch
      %9 = sbr.rel (0) target = $region5
    $region4: #{tpu_custom_call.1} parent=1 // pred_region
      %11 = vsyncadd [#allocation3], 0
      %s12 = sshll.u32 %s0, 4
      %s13 = int_to_ptr.hbm [resolvable:$true] %s12
      %s14 = sshll.u32 [#allocation2], 4
      %s15 = int_to_ptr.vmem [resolvable:$true] %s14
      %20 = dma.hbm_to_vmem [thread:$0]  %s13, 256, %s15, [#allocation3], 128, 128, 8
    $region5: #{tpu_custom_call.1} parent=1 // pred_fallthru
      _
    // Predicated region
    $region6: #{tpu_custom_call.1} parent=1 // pred_check
      _
    $region7: #{tpu_custom_call.1} parent=1 // pred_check_branch
      %22 = sbr.rel (0) target = $region9
    $region8: #{tpu_custom_call.1} parent=1 // pred_region
      %24 = dma.done [#allocation3], 256
    $region9: #{tpu_custom_call.1} parent=1 // pred_fallthru
      _
    %v25 = vld [vmem:[#allocation2] sm:$0xff]
    %v26 = vld [vmem:[#allocation2 + $0x8] sm:$0xff]
    %27 = vst [vmem:[#allocation5] sm:$0xff] %v25
    %28 = vst [vmem:[#allocation5 + $0x8] sm:$0xff] %v25
    %29 = vst [vmem:[#allocation5 + $0x10] sm:$0xff] %v25
    %30 = vst [vmem:[#allocation5 + $0x18] sm:$0xff] %v26
    %31 = vst [vmem:[#allocation5 + $0x20] sm:$0xff] %v26
    %32 = vst [vmem:[#allocation5 + $0x28] sm:$0xff] %v26
    // Predicated region
    $region10: #{tpu_custom_call.1} parent=1 // pred_check
      _
    $region11: #{tpu_custom_call.1} parent=1 // pred_check_branch
      %34 = sbr.rel (0) target = $region13
    $region12: #{tpu_custom_call.1} parent=1 // pred_region
      %36 = vsyncadd [#allocation4], 0
      %s37 = sshll.u32 [#allocation5], 4
      %s38 = int_to_ptr.vmem [resolvable:$true] %s37
      %s39 = sshll.u32 %s1, 4
      %s40 = int_to_ptr.hbm [resolvable:$true] %s39
      %45 = dma.vmem_to_hbm [thread:$0]  %s38, 768, %s40, [#allocation4], 128, 128, 8
    $region13: #{tpu_custom_call.1} parent=1 // pred_fallthru
      _
    // Predicated region
    $region14: #{tpu_custom_call.1} parent=1 // pred_check
      _
    $region15: #{tpu_custom_call.1} parent=1 // pred_check_branch
      %47 = sbr.rel (0) target = $region17
    $region16: #{tpu_custom_call.1} parent=1 // pred_region
      %49 = dma.done [#allocation4], 768
    $region17: #{tpu_custom_call.1} parent=1 // pred_fallthru
      _
    %50 = vsyncpa [#allocation3], 1
    %51 = vsyncpa [#allocation4], 1

</llo_original>
